<compile_context>
chip_gen: v7x
topology: tpu7x:2x2x1
jax: 0.10.0
libtpu: 0.0.40
codegen_flags: <defaults>
</compile_context>

<pallas_src>
import math
import functools

import jax
import jax.numpy as jnp
from jax import lax
from jax.experimental import pallas as pl
from jax.experimental.pallas import tpu as pltpu


# ---------------------------------------------------------------------------
# Kernel: one grid step = one (batch, head).
#   x_ref    : (S, H)  bf16      wq/wk/wv_ref : (H, d) bf16    wo_ref : (d, H) bf16
#   bqkv_ref : (3, d)  f32       bo_ref : (1, H) f32
#   out_ref  : (S, H)            probs_ref : (S, S) f32
#   acc_ref  : (S, H)  f32 VMEM scratch (output-projection accumulator over heads)
# ---------------------------------------------------------------------------
def _attention_head_kernel(x_ref, wq_ref, wk_ref, wv_ref, wo_ref,
                           bqkv_ref, bo_ref, out_ref, probs_ref, acc_ref,
                           *, head_dim):
    h = pl.program_id(1)
    scale = 1.0 / math.sqrt(head_dim)

    x = x_ref[...]                                            # (S, H) bf16

    # ---- per-head Q/K/V projections: bf16 MXU inputs, f32 accumulation -----
    q = (jnp.dot(x, wq_ref[...], preferred_element_type=jnp.float32)
         + bqkv_ref[0:1, :]) * scale                          # (S, d) f32
    k = (jnp.dot(x, wk_ref[...], preferred_element_type=jnp.float32)
         + bqkv_ref[1:2, :])                                  # (S, d) f32
    v = (jnp.dot(x, wv_ref[...], preferred_element_type=jnp.float32)
         + bqkv_ref[2:3, :])                                  # (S, d) f32

    # ---- scores = q @ k^T (contract head_dim; no in-kernel transpose) ------
    s = lax.dot_general(q.astype(jnp.bfloat16), k.astype(jnp.bfloat16),
                        dimension_numbers=(((1,), (1,)), ((), ())),
                        preferred_element_type=jnp.float32)   # (S, S) f32

    # ---- numerically stabilized softmax, exact reciprocal (probs returned) -
    s = s - jnp.max(s, axis=-1, keepdims=True)
    e = jnp.exp(s)
    p = e / jnp.sum(e, axis=-1, keepdims=True)                # (S, S) f32
    probs_ref[...] = p

    # ---- context for this head ---------------------------------------------
    ctx = jnp.dot(p.astype(jnp.bfloat16), v.astype(jnp.bfloat16),
                  preferred_element_type=jnp.float32)         # (S, d) f32

    # ---- output projection, accumulated over heads --------------------------
    @pl.when(h == 0)
    def _():
        acc_ref[...] = jnp.zeros_like(acc_ref)

    acc_ref[...] += jnp.dot(ctx.astype(jnp.bfloat16), wo_ref[...],
                            preferred_element_type=jnp.float32)   # (S, H)

    @pl.when(h == pl.num_programs(1) - 1)
    def _():
        out_ref[...] = (acc_ref[...] + bo_ref[...]).astype(out_ref.dtype)


def _derived_vmem_limit(block_bytes):
    """VMEM limit derived from the double-buffered block footprint, clamped to
    a fraction of the attached chip's physical VMEM (no hard-coded 32 MiB)."""
    need = 4 * block_bytes + (4 << 20)     # ~2x double-buffering + compiler headroom
    try:
        cap = pltpu.get_tpu_info().vmem_capacity_bytes
    except Exception:
        cap = 64 << 20                     # v7x per-TC capacity as conservative floor
    return int(min(max(need, 8 << 20), cap // 2))


# ---------------------------------------------------------------------------
# Wrapper
# ---------------------------------------------------------------------------
def attention_forward(hidden_states, params, *, num_heads):
    """hidden_states: (B, S, H).  params: (H,H) weights and (H,) biases."""
    B, S, H = hidden_states.shape
    NH = num_heads
    d = H // NH
    out_dtype = hidden_states.dtype

    # ---- wrapper-side layout plumbing: bf16 MXU operands, per-head weights --
    x_bf16 = hidden_states.astype(jnp.bfloat16)                           # (B,S,H)
    wq_h = params["wq"].reshape(H, NH, d).transpose(1, 0, 2).astype(jnp.bfloat16)
    wk_h = params["wk"].reshape(H, NH, d).transpose(1, 0, 2).astype(jnp.bfloat16)
    wv_h = params["wv"].reshape(H, NH, d).transpose(1, 0, 2).astype(jnp.bfloat16)
    wo_h = params["wo"].reshape(NH, d, H).astype(jnp.bfloat16)            # (NH,d,H)
    bqkv = (jnp.stack([params["bq"], params["bk"], params["bv"]], axis=0)
            .reshape(3, NH, d).transpose(1, 0, 2).astype(jnp.float32))    # (NH,3,d)
    bo = params["bo"].reshape(1, H).astype(jnp.float32)

    kernel = functools.partial(_attention_head_kernel, head_dim=d)

    # per-step VMEM block footprint in bytes (for the derived vmem limit)
    blk_bytes = (
        S * H * 2                 # x block (bf16)
        + 3 * H * d * 2           # wq/wk/wv head slices (bf16)
        + d * H * 2               # wo head slice (bf16)
        + 3 * d * 4 + H * 4       # biases (f32)
        + S * H * jnp.dtype(out_dtype).itemsize   # out block
        + S * S * 4               # probs block (f32)
        + S * H * 4               # accumulator scratch (f32)
    )

    out, probs = pl.pallas_call(
        kernel,
        out_shape=(
            jax.ShapeDtypeStruct((B, S, H), out_dtype),
            jax.ShapeDtypeStruct((B, NH, S, S), jnp.float32),
        ),
        grid_spec=pltpu.PrefetchScalarGridSpec(
            num_scalar_prefetch=0,
            grid=(B, NH),                                          # (parallel, reduction)
            in_specs=[
                pl.BlockSpec((None, S, H), lambda b, h: (b, 0, 0)),   # x (resident over h)
                pl.BlockSpec((None, H, d), lambda b, h: (h, 0, 0)),   # Wq head slice
                pl.BlockSpec((None, H, d), lambda b, h: (h, 0, 0)),   # Wk head slice
                pl.BlockSpec((None, H, d), lambda b, h: (h, 0, 0)),   # Wv head slice
                pl.BlockSpec((None, d, H), lambda b, h: (h, 0, 0)),   # Wo head slice
                pl.BlockSpec((None, 3, d), lambda b, h: (h, 0, 0)),   # fused bq/bk/bv
                pl.BlockSpec((1, H), lambda b, h: (0, 0)),            # bo (resident)
            ],
            out_specs=[
                pl.BlockSpec((None, S, H), lambda b, h: (b, 0, 0)),         # out (acc over h)
                pl.BlockSpec((None, None, S, S), lambda b, h: (b, h, 0, 0)),  # probs
            ],
            scratch_shapes=[
                pltpu.VMEM((S, H), jnp.float32),      # output-projection accumulator
            ],
        ),
        compiler_params=pltpu.CompilerParams(
            dimension_semantics=("parallel", "arbitrary"),
            vmem_limit_bytes=_derived_vmem_limit(blk_bytes),
        ),
    )(x_bf16, wq_h, wk_h, wv_h, wo_h, bqkv, bo)

    return out, probs


# ---------------------------------------------------------------------------
# Pure-JAX reference (mirrors the PyTorch forward, eval mode)
# ---------------------------------------------------------------------------
def attention_reference(x, params, *, num_heads):
    B, S, H = x.shape
    d = H // num_heads
    q = x @ params["wq"] + params["bq"]
    k = x @ params["wk"] + params["bk"]
    v = x @ params["wv"] + params["bv"]

    def split(t):  # (B,S,H) -> (B,nh,S,d)
        return t.reshape(B, S, num_heads, d).transpose(0, 2, 1, 3)

    qh, kh, vh = split(q), split(k), split(v)
    scores = jnp.einsum("bhqd,bhkd->bhqk", qh, kh) / math.sqrt(d)
    probs = jax.nn.softmax(scores, axis=-1)
    ctx = jnp.einsum("bhqk,bhkd->bhqd", probs, vh)
    ctx = ctx.transpose(0, 2, 1, 3).reshape(B, S, H)
    out = ctx @ params["wo"] + params["bo"]
    return out, probs


# ---------------------------------------------------------------------------
if __name__ == "__main__":
    # config: hidden_size=32, num_heads=4 -> head_dim=8; batch=2, seq=8
    B, S, H, NH = 2, 8, 32, 4

    key = jax.random.PRNGKey(0)
    keys = jax.random.split(key, 10)
    w_scale = 0.05

    params = {
        "wq": w_scale * jax.random.normal(keys[0], (H, H), jnp.float32),
        "bq": w_scale * jax.random.normal(keys[1], (H,), jnp.float32),
        "wk": w_scale * jax.random.normal(keys[2], (H, H), jnp.float32),
        "bk": w_scale * jax.random.normal(keys[3], (H,), jnp.float32),
        "wv": w_scale * jax.random.normal(keys[4], (H, H), jnp.float32),
        "bv": w_scale * jax.random.normal(keys[5], (H,), jnp.float32),
        "wo": w_scale * jax.random.normal(keys[6], (H, H), jnp.float32),
        "bo": w_scale * jax.random.normal(keys[7], (H,), jnp.float32),
    }
    x = jax.random.normal(keys[8], (B, S, H), jnp.float32)

    out, probs = attention_forward(x, params, num_heads=NH)
    out = jax.block_until_ready(out)
    probs = jax.block_until_ready(probs)

    ref_out, ref_probs = attention_reference(x, params, num_heads=NH)

    assert out.shape == (B, S, H)
    assert probs.shape == (B, NH, S, S)
    # bf16 MXU inputs (f32 accumulation); tolerances relaxed vs pure-fp32.
    assert jnp.allclose(out, ref_out, atol=5e-3, rtol=5e-2), \
        f"out mismatch: max|diff|={float(jnp.max(jnp.abs(out - ref_out)))}"
    assert jnp.allclose(probs, ref_probs, atol=2e-3, rtol=5e-2), \
        f"probs mismatch: max|diff|={float(jnp.max(jnp.abs(probs - ref_probs)))}"

    print("KERNEL_OK")
</pallas_src>

<mosaic_0001>
module attributes {stable_mosaic.version = 11 : i64} {
  func.func @_attention_head_kernel(%arg0: i32, %arg1: i32, %arg2: memref<1x8x32xbf16, #tpu.memory_space<vmem>>, %arg3: memref<1x32x8xbf16, #tpu.memory_space<vmem>>, %arg4: memref<1x32x8xbf16, #tpu.memory_space<vmem>>, %arg5: memref<1x32x8xbf16, #tpu.memory_space<vmem>>, %arg6: memref<1x8x32xbf16, #tpu.memory_space<vmem>>, %arg7: memref<1x3x8xf32, #tpu.memory_space<vmem>>, %arg8: memref<1x32xf32, #tpu.memory_space<vmem>>, %arg9: memref<1x8x32xf32, #tpu.memory_space<vmem>>, %arg10: memref<1x1x8x8xf32, #tpu.memory_space<vmem>>, %arg11: memref<8x32xf32, #tpu.memory_space<vmem>>) attributes {dimension_semantics = [#tpu.dimension_semantics<parallel>, #tpu.dimension_semantics<arbitrary>], iteration_bounds = array<i64: 2, 4>, scalar_prefetch = 0 : i64, scratch_operands = 1 : i64, tpu.core_type = #tpu.core_type<tc>, window_params = [{transform_indices = @transform_0, window_bounds = array<i64: 1, 8, 32>}, {transform_indices = @transform_1, window_bounds = array<i64: 1, 32, 8>}, {transform_indices = @transform_2, window_bounds = array<i64: 1, 32, 8>}, {transform_indices = @transform_3, window_bounds = array<i64: 1, 32, 8>}, {transform_indices = @transform_4, window_bounds = array<i64: 1, 8, 32>}, {transform_indices = @transform_5, window_bounds = array<i64: 1, 3, 8>}, {pipeline_mode = #tpu.pipeline_mode<synchronous>, transform_indices = @transform_6, window_bounds = array<i64: 1, 32>}, {transform_indices = @transform_7, window_bounds = array<i64: 1, 8, 32>}, {transform_indices = @transform_8, window_bounds = array<i64: 1, 1, 8, 8>}]} {
    %c0 = arith.constant 0 : index
    %c0_0 = arith.constant 0 : index
    %c0_1 = arith.constant 0 : index
    %0 = vector.load %arg2[%c0, %c0_0, %c0_1] : memref<1x8x32xbf16, #tpu.memory_space<vmem>>, vector<1x8x32xbf16>
    %1 = vector.shape_cast %0 : vector<1x8x32xbf16> to vector<8x32xbf16>
    %c0_2 = arith.constant 0 : index
    %c0_3 = arith.constant 0 : index
    %c0_4 = arith.constant 0 : index
    %2 = vector.load %arg3[%c0_2, %c0_3, %c0_4] : memref<1x32x8xbf16, #tpu.memory_space<vmem>>, vector<1x32x8xbf16>
    %3 = vector.shape_cast %2 : vector<1x32x8xbf16> to vector<32x8xbf16>
    %cst = arith.constant dense<0.000000e+00> : vector<8x8xf32>
    %4 = tpu.matmul %1, %3, %cst {dimension_numbers = #tpu.dot_dimension_numbers<[1], [0], [0], [1], [0, 0, 1, 1], [], []>} : vector<8x32xbf16>, vector<32x8xbf16>, vector<8x8xf32> -> vector<8x8xf32>
    %c0_5 = arith.constant 0 : index
    %c0_6 = arith.constant 0 : index
    %c0_7 = arith.constant 0 : index
    %5 = vector.load %arg7[%c0_5, %c0_6, %c0_7] : memref<1x3x8xf32, #tpu.memory_space<vmem>>, vector<1x1x8xf32>
    %6 = vector.shape_cast %5 : vector<1x1x8xf32> to vector<1x8xf32>
    %7 = vector.broadcast %6 : vector<1x8xf32> to vector<8x8xf32>
    %8 = arith.addf %4, %7 : vector<8x8xf32>
    %cst_8 = arith.constant 0.353553385 : f32
    %9 = vector.broadcast %cst_8 : f32 to vector<8x8xf32>
    %10 = arith.mulf %8, %9 : vector<8x8xf32>
    %c0_9 = arith.constant 0 : index
    %c0_10 = arith.constant 0 : index
    %c0_11 = arith.constant 0 : index
    %11 = vector.load %arg4[%c0_9, %c0_10, %c0_11] : memref<1x32x8xbf16, #tpu.memory_space<vmem>>, vector<1x32x8xbf16>
    %12 = vector.shape_cast %11 : vector<1x32x8xbf16> to vector<32x8xbf16>
    %cst_12 = arith.constant dense<0.000000e+00> : vector<8x8xf32>
    %13 = tpu.matmul %1, %12, %cst_12 {dimension_numbers = #tpu.dot_dimension_numbers<[1], [0], [0], [1], [0, 0, 1, 1], [], []>} : vector<8x32xbf16>, vector<32x8xbf16>, vector<8x8xf32> -> vector<8x8xf32>
    %c0_13 = arith.constant 0 : index
    %c1 = arith.constant 1 : index
    %c0_14 = arith.constant 0 : index
    %14 = vector.load %arg7[%c0_13, %c1, %c0_14] : memref<1x3x8xf32, #tpu.memory_space<vmem>>, vector<1x1x8xf32>
    %15 = vector.shape_cast %14 : vector<1x1x8xf32> to vector<1x8xf32>
    %16 = vector.broadcast %15 : vector<1x8xf32> to vector<8x8xf32>
    %17 = arith.addf %13, %16 : vector<8x8xf32>
    %c0_15 = arith.constant 0 : index
    %c0_16 = arith.constant 0 : index
    %c0_17 = arith.constant 0 : index
    %18 = vector.load %arg5[%c0_15, %c0_16, %c0_17] : memref<1x32x8xbf16, #tpu.memory_space<vmem>>, vector<1x32x8xbf16>
    %19 = vector.shape_cast %18 : vector<1x32x8xbf16> to vector<32x8xbf16>
    %cst_18 = arith.constant dense<0.000000e+00> : vector<8x8xf32>
    %20 = tpu.matmul %1, %19, %cst_18 {dimension_numbers = #tpu.dot_dimension_numbers<[1], [0], [0], [1], [0, 0, 1, 1], [], []>} : vector<8x32xbf16>, vector<32x8xbf16>, vector<8x8xf32> -> vector<8x8xf32>
    %c0_19 = arith.constant 0 : index
    %c2 = arith.constant 2 : index
    %c0_20 = arith.constant 0 : index
    %21 = vector.load %arg7[%c0_19, %c2, %c0_20] : memref<1x3x8xf32, #tpu.memory_space<vmem>>, vector<1x1x8xf32>
    %22 = vector.shape_cast %21 : vector<1x1x8xf32> to vector<1x8xf32>
    %23 = vector.broadcast %22 : vector<1x8xf32> to vector<8x8xf32>
    %24 = arith.addf %20, %23 : vector<8x8xf32>
    %25 = arith.truncf %10 : vector<8x8xf32> to vector<8x8xbf16>
    %26 = arith.truncf %17 : vector<8x8xf32> to vector<8x8xbf16>
    %cst_21 = arith.constant dense<0.000000e+00> : vector<8x8xf32>
    %27 = tpu.matmul %25, %26, %cst_21 {dimension_numbers = #tpu.dot_dimension_numbers<[1], [1], [0], [0], [0, 0, 1, 0], [], []>} : vector<8x8xbf16>, vector<8x8xbf16>, vector<8x8xf32> -> vector<8x8xf32>
    %cst_22 = arith.constant dense<0xFF800000> : vector<8xf32>
    %28 = vector.multi_reduction <maximumf>, %27, %cst_22 [1] : vector<8x8xf32> to vector<8xf32>
    %29 = vector.shape_cast %28 : vector<8xf32> to vector<8x1xf32>
    %30 = vector.broadcast %29 : vector<8x1xf32> to vector<8x8xf32>
    %31 = arith.subf %27, %30 : vector<8x8xf32>
    %32 = math.exp %31 : vector<8x8xf32>
    %cst_23 = arith.constant dense<0.000000e+00> : vector<8xf32>
    %33 = vector.multi_reduction <add>, %32, %cst_23 [1] : vector<8x8xf32> to vector<8xf32>
    %34 = vector.shape_cast %33 : vector<8xf32> to vector<8x1xf32>
    %35 = vector.broadcast %34 : vector<8x1xf32> to vector<8x8xf32>
    %36 = arith.divf %32, %35 : vector<8x8xf32>
    %c0_24 = arith.constant 0 : index
    %c0_25 = arith.constant 0 : index
    %c0_26 = arith.constant 0 : index
    %c0_27 = arith.constant 0 : index
    %37 = vector.load %arg10[%c0_24, %c0_25, %c0_26, %c0_27] : memref<1x1x8x8xf32, #tpu.memory_space<vmem>>, vector<1x1x8x8xf32>
    %38 = vector.shape_cast %37 : vector<1x1x8x8xf32> to vector<8x8xf32>
    %39 = vector.shape_cast %36 : vector<8x8xf32> to vector<1x1x8x8xf32>
    tpu.vector_store %arg10[%c0_24, %c0_25, %c0_26, %c0_27], %39 {strides = array<i32>} : memref<1x1x8x8xf32, #tpu.memory_space<vmem>>, vector<1x1x8x8xf32>,
    %40 = arith.truncf %36 : vector<8x8xf32> to vector<8x8xbf16>
    %41 = arith.truncf %24 : vector<8x8xf32> to vector<8x8xbf16>
    %cst_28 = arith.constant dense<0.000000e+00> : vector<8x8xf32>
    %42 = tpu.matmul %40, %41, %cst_28 {dimension_numbers = #tpu.dot_dimension_numbers<[1], [0], [0], [1], [0, 0, 1, 1], [], []>} : vector<8x8xbf16>, vector<8x8xbf16>, vector<8x8xf32> -> vector<8x8xf32>
    %c0_i32 = arith.constant 0 : i32
    %43 = arith.cmpi eq, %arg1, %c0_i32 : i32
    %44 = arith.extui %43 : i1 to i32
    %c0_i32_29 = arith.constant 0 : i32
    %45 = arith.cmpi ne, %44, %c0_i32_29 : i32
    scf.if %45 {
      %cst_39 = arith.constant 0.000000e+00 : f32
      %56 = vector.broadcast %cst_39 : f32 to vector<8x32xf32>
      %c0_40 = arith.constant 0 : index
      %c0_41 = arith.constant 0 : index
      %57 = vector.load %arg11[%c0_40, %c0_41] : memref<8x32xf32, #tpu.memory_space<vmem>>, vector<8x32xf32>
      tpu.vector_store %arg11[%c0_40, %c0_41], %56 {strides = array<i32>} : memref<8x32xf32, #tpu.memory_space<vmem>>, vector<8x32xf32>,
    } else {
    }
    %c0_30 = arith.constant 0 : index
    %c0_31 = arith.constant 0 : index
    %46 = vector.load %arg11[%c0_30, %c0_31] : memref<8x32xf32, #tpu.memory_space<vmem>>, vector<8x32xf32>
    %47 = arith.truncf %42 : vector<8x8xf32> to vector<8x8xbf16>
    %c0_32 = arith.constant 0 : index
    %c0_33 = arith.constant 0 : index
    %c0_34 = arith.constant 0 : index
    %48 = vector.load %arg6[%c0_32, %c0_33, %c0_34] : memref<1x8x32xbf16, #tpu.memory_space<vmem>>, vector<1x8x32xbf16>
    %49 = vector.shape_cast %48 : vector<1x8x32xbf16> to vector<8x32xbf16>
    %cst_35 = arith.constant dense<0.000000e+00> : vector<8x32xf32>
    %50 = tpu.matmul %47, %49, %cst_35 {dimension_numbers = #tpu.dot_dimension_numbers<[1], [0], [0], [1], [0, 0, 1, 1], [], []>} : vector<8x8xbf16>, vector<8x32xbf16>, vector<8x32xf32> -> vector<8x32xf32>
    %51 = arith.addf %46, %50 : vector<8x32xf32>
    %c0_36 = arith.constant 0 : index
    %c0_37 = arith.constant 0 : index
    %52 = vector.load %arg11[%c0_36, %c0_37] : memref<8x32xf32, #tpu.memory_space<vmem>>, vector<8x32xf32>
    tpu.vector_store %arg11[%c0_36, %c0_37], %51 {strides = array<i32>} : memref<8x32xf32, #tpu.memory_space<vmem>>, vector<8x32xf32>,
    %c3_i32 = arith.constant 3 : i32
    %53 = arith.cmpi eq, %arg1, %c3_i32 : i32
    %54 = arith.extui %53 : i1 to i32
    %c0_i32_38 = arith.constant 0 : i32
    %55 = arith.cmpi ne, %54, %c0_i32_38 : i32
    scf.if %55 {
      %c0_39 = arith.constant 0 : index
      %c0_40 = arith.constant 0 : index
      %56 = vector.load %arg11[%c0_39, %c0_40] : memref<8x32xf32, #tpu.memory_space<vmem>>, vector<8x32xf32>
      %c0_41 = arith.constant 0 : index
      %c0_42 = arith.constant 0 : index
      %57 = vector.load %arg8[%c0_41, %c0_42] : memref<1x32xf32, #tpu.memory_space<vmem>>, vector<1x32xf32>
      %58 = vector.broadcast %57 : vector<1x32xf32> to vector<8x32xf32>
      %59 = arith.addf %56, %58 : vector<8x32xf32>
      %c0_43 = arith.constant 0 : index
      %c0_44 = arith.constant 0 : index
      %c0_45 = arith.constant 0 : index
      %60 = vector.load %arg9[%c0_43, %c0_44, %c0_45] : memref<1x8x32xf32, #tpu.memory_space<vmem>>, vector<1x8x32xf32>
      %61 = vector.shape_cast %60 : vector<1x8x32xf32> to vector<8x32xf32>
      %62 = vector.shape_cast %59 : vector<8x32xf32> to vector<1x8x32xf32>
      tpu.vector_store %arg9[%c0_43, %c0_44, %c0_45], %62 {strides = array<i32>} : memref<1x8x32xf32, #tpu.memory_space<vmem>>, vector<1x8x32xf32>,
    } else {
    }
    return
  }
  func.func @transform_0(%arg0: i32, %arg1: i32) -> (i32, i32, i32) {
    %c0_i32 = arith.constant 0 : i32
    %c0_i32_0 = arith.constant 0 : i32
    %c0_i32_1 = arith.constant 0 : i32
    return %arg0, %c0_i32, %c0_i32_0 : i32, i32, i32
  }
  func.func @transform_1(%arg0: i32, %arg1: i32) -> (i32, i32, i32) {
    %c0_i32 = arith.constant 0 : i32
    %c0_i32_0 = arith.constant 0 : i32
    %c0_i32_1 = arith.constant 0 : i32
    return %arg1, %c0_i32, %c0_i32_0 : i32, i32, i32
  }
  func.func @transform_2(%arg0: i32, %arg1: i32) -> (i32, i32, i32) {
    %c0_i32 = arith.constant 0 : i32
    %c0_i32_0 = arith.constant 0 : i32
    %c0_i32_1 = arith.constant 0 : i32
    return %arg1, %c0_i32, %c0_i32_0 : i32, i32, i32
  }
  func.func @transform_3(%arg0: i32, %arg1: i32) -> (i32, i32, i32) {
    %c0_i32 = arith.constant 0 : i32
    %c0_i32_0 = arith.constant 0 : i32
    %c0_i32_1 = arith.constant 0 : i32
    return %arg1, %c0_i32, %c0_i32_0 : i32, i32, i32
  }
  func.func @transform_4(%arg0: i32, %arg1: i32) -> (i32, i32, i32) {
    %c0_i32 = arith.constant 0 : i32
    %c0_i32_0 = arith.constant 0 : i32
    %c0_i32_1 = arith.constant 0 : i32
    return %arg1, %c0_i32, %c0_i32_0 : i32, i32, i32
  }
  func.func @transform_5(%arg0: i32, %arg1: i32) -> (i32, i32, i32) {
    %c0_i32 = arith.constant 0 : i32
    %c0_i32_0 = arith.constant 0 : i32
    %c0_i32_1 = arith.constant 0 : i32
    return %arg1, %c0_i32, %c0_i32_0 : i32, i32, i32
  }
  func.func @transform_6(%arg0: i32, %arg1: i32) -> (i32, i32) {
    %c0_i32 = arith.constant 0 : i32
    %c0_i32_0 = arith.constant 0 : i32
    %c0_i32_1 = arith.constant 0 : i32
    return %c0_i32, %c0_i32_0 : i32, i32
  }
  func.func @transform_7(%arg0: i32, %arg1: i32) -> (i32, i32, i32) {
    %c0_i32 = arith.constant 0 : i32
    %c0_i32_0 = arith.constant 0 : i32
    %c0_i32_1 = arith.constant 0 : i32
    return %arg0, %c0_i32, %c0_i32_0 : i32, i32, i32
  }
  func.func @transform_8(%arg0: i32, %arg1: i32) -> (i32, i32, i32, i32) {
    %c0_i32 = arith.constant 0 : i32
    %c0_i32_0 = arith.constant 0 : i32
    %c0_i32_1 = arith.constant 0 : i32
    return %arg0, %arg1, %c0_i32, %c0_i32_0 : i32, i32, i32, i32
  }
}

</mosaic_0001>

<llo_original>
// kernel: tpu_custom_call.1
$region0: #{tpu_custom_call.1}
  #allocation0 [shape = 'u32[]', space=smem, size = 0x4, offset = 0x4, fixed_abs, tag = 'smem constant byte address 0x4 - core index']
  #allocation1 [shape = 'u32[144,128]{1,0:T(1,128)}', space=vmem, size = 0x12000, scoped, tag = 'internal scratch']
  #allocation2 [shape = 'f32[8,32]{1,0:T(8,128)}', space=vmem, size = 0x1000, scoped, tag = 'scratch operand']
  %s0 = inlined_call_operand.vmem [shape: bf16[2,8,32], index: 0, kind: input, shape index: {}]
  %s1 = inlined_call_operand.vmem [shape: bf16[4,32,8], index: 1, kind: input, shape index: {}]
  %s2 = inlined_call_operand.vmem [shape: bf16[4,32,8], index: 2, kind: input, shape index: {}]
  %s3 = inlined_call_operand.vmem [shape: bf16[4,32,8], index: 3, kind: input, shape index: {}]
  %s4 = inlined_call_operand.vmem [shape: bf16[4,8,32], index: 4, kind: input, shape index: {}]
  %s5 = inlined_call_operand.vmem [shape: f32[4,3,8], index: 5, kind: input, shape index: {}]
  %s6 = inlined_call_operand.vmem [shape: f32[1,32], index: 6, kind: input, shape index: {}]
  %s7 = inlined_call_operand.hbm [shape: f32[2,8,32], index: 7, kind: output, shape index: {0}]
  %s8 = inlined_call_operand.hbm [shape: f32[2,4,8,8], index: 8, kind: output, shape index: {1}]
  %9 = xla_tuple %s7, %s8
  %s10 = sld [smem:[#allocation0]]
  $region77: #{tpu_custom_call.1} parent=0
    _
  %s12 = ssub.s32 1, %s10
  %s13 = scalar_select 0, %s12, %s10
  $region1: #{tpu_custom_call.1} parent=0
    #allocation3 [shape = 'u8[8192]{0}', space=vmem, size = 0x2000, scoped, tag = 'output window, operand 0']
    #allocation4 [shape = 's32[2]{0}', space=sflag, size = 0x8, scoped, tag = 'scoped memory for tpu_custom_call.1']
    #allocation5 [shape = 'u8[8192]{0}', space=vmem, size = 0x2000, scoped, tag = 'output window, operand 1']
    #allocation6 [shape = 's32[2]{0}', space=sflag, size = 0x8, scoped, tag = 'scoped memory for tpu_custom_call.1']
    %14 = vsyncpa [#allocation4], 0
    %s15 = scalar_lea.sflag [#allocation4], 1
    %16 = vsyncpa %s15, 0
    %17 = vsyncpa [#allocation6], 0
    %s18 = scalar_lea.sflag [#allocation6], 1
    %19 = vsyncpa %s18, 0
    loop: start=0, step=1, limit=10
    $region2: #{tpu_custom_call.1} parent=1 // loop_pre_header
      _
    $region3: #{tpu_custom_call.1} parent=1 // loop_header
      %s21 = sphi 0, %s25
      %p22 = scmp.ge.s32.totalorder %s21, 10
      %s28 = sphi 0, %s40
      %s29 = sphi 0, %s36
      %s30 = sphi 0, %s28
      %s31 = sphi 0, %s29
      %s32 = sphi 0, %s30
      %s33 = sphi 0, %s31
      %s43 = sphi 0, %s45
      %s46 = sphi 0, %s43
      %s47 = sphi 0, %s46
      %s63 = sphi 0, %s47
      %s69 = sphi 0, %s71
      %s72 = sphi 0, %s69
      %s73 = sphi 0, %s72
      %s89 = sphi 0, %s73
      %s95 = sphi 0, %s97
      %s98 = sphi 0, %s95
      %s99 = sphi 0, %s98
      %s115 = sphi 0, %s99
      %s121 = sphi 0, %s123
      %s124 = sphi 0, %s121
      %s125 = sphi 0, %s124
      %s141 = sphi 0, %s125
      %s147 = sphi 0, %s149
      %s150 = sphi 0, %s147
      %s151 = sphi 0, %s150
      %s167 = sphi 0, %s151
      %s173 = sphi 0, %s175
      %s176 = sphi 0, %s173
      %s177 = sphi 0, %s176
      %s193 = sphi 0, %s177
      %s197 = sphi 0, %s197
      %s199 = sphi 0, %s197
      %s200 = sphi 0, %s199
      %s214 = sphi 0, %s200
      %s220 = sphi 0, %s222
      %s223 = sphi 0, %s220
      %s224 = sphi 0, %s223
      %s240 = sphi 0, %s224
      %s248 = sphi 0, %s250
      %s251 = sphi 0, %s248
      %s252 = sphi 0, %s251
      %s268 = sphi 0, %s252
    $region4: #{tpu_custom_call.1} parent=1 // loop_header_branch
      %24 = sbr.rel (%p22) target = $region8
    $region5: #{tpu_custom_call.1} parent=1 // loop_body
      %s26 = ssub.s32 %s21, 1
      %s27 = ssub.s32 %s21, 2
      %s34 = sadd.s32 1, %s29
      %p35 = scmp.ge.s32.totalorder %s34, 4
      %s36 = scalar_select %p35, 0, %s34
      %s37 = sadd.s32 1, %s28
      %s38 = scalar_select %p35, %s37, %s28
      %p39 = scmp.ge.s32.totalorder %s38, 2
      %s40 = scalar_select %p39, 0, %s38
      %s41 = ssub.s32 %s28, %s40
      %p42 = scmp.eq.s32.totalorder %s41, 0
      %s44 = sadd.s32 %s43, 1
      %s45 = scalar_select %p42, %s43, %s44
      %p48 = pneg %p42
      %p49 = scmp.eq.s32.totalorder %s21, 7
      %p50 = por %p48, %p49
      %p51 = scmp.ne.s32.totalorder %s43, %s46
      %p52 = scmp.eq.s32.totalorder %s21, 0
      %p53 = por %p51, %p52
      %p54 = scmp.ne.s32.totalorder %s43, %s46
      %p55 = scmp.eq.s32.totalorder %s26, 7
      %p56 = por %p54, %p55
      %p57 = scmp.ne.s32.totalorder %s46, %s47
      %p58 = scmp.eq.s32.totalorder %s26, 0
      %p59 = por %p57, %p58
      %p60 = scmp.ne.s32.totalorder %s46, %s47
      %p61 = scmp.eq.s32.totalorder %s27, 7
      %p62 = por %p60, %p61
      %p64 = scmp.ne.s32.totalorder %s47, %s63
      %p65 = scmp.eq.s32.totalorder %s27, 0
      %p66 = por %p64, %p65
      %s67 = ssub.s32 %s29, %s36
      %p68 = scmp.eq.s32.totalorder %s67, 0
      %s70 = sadd.s32 %s69, 1
      %s71 = scalar_select %p68, %s69, %s70
      %p74 = pneg %p68
      %p75 = scmp.eq.s32.totalorder %s21, 7
      %p76 = por %p74, %p75
      %p77 = scmp.ne.s32.totalorder %s69, %s72
      %p78 = scmp.eq.s32.totalorder %s21, 0
      %p79 = por %p77, %p78
      %p80 = scmp.ne.s32.totalorder %s69, %s72
      %p81 = scmp.eq.s32.totalorder %s26, 7
      %p82 = por %p80, %p81
      %p83 = scmp.ne.s32.totalorder %s72, %s73
      %p84 = scmp.eq.s32.totalorder %s26, 0
      %p85 = por %p83, %p84
      %p86 = scmp.ne.s32.totalorder %s72, %s73
      %p87 = scmp.eq.s32.totalorder %s27, 7
      %p88 = por %p86, %p87
      %p90 = scmp.ne.s32.totalorder %s73, %s89
      %p91 = scmp.eq.s32.totalorder %s27, 0
      %p92 = por %p90, %p91
      %s93 = ssub.s32 %s29, %s36
      %p94 = scmp.eq.s32.totalorder %s93, 0
      %s96 = sadd.s32 %s95, 1
      %s97 = scalar_select %p94, %s95, %s96
      %p100 = pneg %p94
      %p101 = scmp.eq.s32.totalorder %s21, 7
      %p102 = por %p100, %p101
      %p103 = scmp.ne.s32.totalorder %s95, %s98
      %p104 = scmp.eq.s32.totalorder %s21, 0
      %p105 = por %p103, %p104
      %p106 = scmp.ne.s32.totalorder %s95, %s98
      %p107 = scmp.eq.s32.totalorder %s26, 7
      %p108 = por %p106, %p107
      %p109 = scmp.ne.s32.totalorder %s98, %s99
      %p110 = scmp.eq.s32.totalorder %s26, 0
      %p111 = por %p109, %p110
      %p112 = scmp.ne.s32.totalorder %s98, %s99
      %p113 = scmp.eq.s32.totalorder %s27, 7
      %p114 = por %p112, %p113
      %p116 = scmp.ne.s32.totalorder %s99, %s115
      %p117 = scmp.eq.s32.totalorder %s27, 0
      %p118 = por %p116, %p117
      %s119 = ssub.s32 %s29, %s36
      %p120 = scmp.eq.s32.totalorder %s119, 0
      %s122 = sadd.s32 %s121, 1
      %s123 = scalar_select %p120, %s121, %s122
      %p126 = pneg %p120
      %p127 = scmp.eq.s32.totalorder %s21, 7
      %p128 = por %p126, %p127
      %p129 = scmp.ne.s32.totalorder %s121, %s124
      %p130 = scmp.eq.s32.totalorder %s21, 0
      %p131 = por %p129, %p130
      %p132 = scmp.ne.s32.totalorder %s121, %s124
      %p133 = scmp.eq.s32.totalorder %s26, 7
      %p134 = por %p132, %p133
      %p135 = scmp.ne.s32.totalorder %s124, %s125
      %p136 = scmp.eq.s32.totalorder %s26, 0
      %p137 = por %p135, %p136
      %p138 = scmp.ne.s32.totalorder %s124, %s125
      %p139 = scmp.eq.s32.totalorder %s27, 7
      %p140 = por %p138, %p139
      %p142 = scmp.ne.s32.totalorder %s125, %s141
      %p143 = scmp.eq.s32.totalorder %s27, 0
      %p144 = por %p142, %p143
      %s145 = ssub.s32 %s29, %s36
      %p146 = scmp.eq.s32.totalorder %s145, 0
      %s148 = sadd.s32 %s147, 1
      %s149 = scalar_select %p146, %s147, %s148
      %p152 = pneg %p146
      %p153 = scmp.eq.s32.totalorder %s21, 7
      %p154 = por %p152, %p153
      %p155 = scmp.ne.s32.totalorder %s147, %s150
      %p156 = scmp.eq.s32.totalorder %s21, 0
      %p157 = por %p155, %p156
      %p158 = scmp.ne.s32.totalorder %s147, %s150
      %p159 = scmp.eq.s32.totalorder %s26, 7
      %p160 = por %p158, %p159
      %p161 = scmp.ne.s32.totalorder %s150, %s151
      %p162 = scmp.eq.s32.totalorder %s26, 0
      %p163 = por %p161, %p162
      %p164 = scmp.ne.s32.totalorder %s150, %s151
      %p165 = scmp.eq.s32.totalorder %s27, 7
      %p166 = por %p164, %p165
      %p168 = scmp.ne.s32.totalorder %s151, %s167
      %p169 = scmp.eq.s32.totalorder %s27, 0
      %p170 = por %p168, %p169
      %s171 = ssub.s32 %s29, %s36
      %p172 = scmp.eq.s32.totalorder %s171, 0
      %s174 = sadd.s32 %s173, 1
      %s175 = scalar_select %p172, %s173, %s174
      %p178 = pneg %p172
      %p179 = scmp.eq.s32.totalorder %s21, 7
      %p180 = por %p178, %p179
      %p181 = scmp.ne.s32.totalorder %s173, %s176
      %p182 = scmp.eq.s32.totalorder %s21, 0
      %p183 = por %p181, %p182
      %p184 = scmp.ne.s32.totalorder %s173, %s176
      %p185 = scmp.eq.s32.totalorder %s26, 7
      %p186 = por %p184, %p185
      %p187 = scmp.ne.s32.totalorder %s176, %s177
      %p188 = scmp.eq.s32.totalorder %s26, 0
      %p189 = por %p187, %p188
      %p190 = scmp.ne.s32.totalorder %s176, %s177
      %p191 = scmp.eq.s32.totalorder %s27, 7
      %p192 = por %p190, %p191
      %p194 = scmp.ne.s32.totalorder %s177, %s193
      %p195 = scmp.eq.s32.totalorder %s27, 0
      %p196 = por %p194, %p195
      %s198 = sadd.s32 %s197, 1
      %p201 = scmp.eq.s32.totalorder %s21, 7
      %p202 = scmp.ne.s32.totalorder %s197, %s199
      %p203 = scmp.eq.s32.totalorder %s21, 0
      %p204 = por %p202, %p203
      %p205 = scmp.ne.s32.totalorder %s197, %s199
      %p206 = scmp.eq.s32.totalorder %s26, 7
      %p207 = por %p205, %p206
      %p208 = scmp.ne.s32.totalorder %s199, %s200
      %p209 = scmp.eq.s32.totalorder %s26, 0
      %p210 = por %p208, %p209
      %p211 = scmp.ne.s32.totalorder %s199, %s200
      %p212 = scmp.eq.s32.totalorder %s27, 7
      %p213 = por %p211, %p212
      %p215 = scmp.ne.s32.totalorder %s200, %s214
      %p216 = scmp.eq.s32.totalorder %s27, 0
      %p217 = por %p215, %p216
      %s218 = ssub.s32 %s28, %s40
      %p219 = scmp.eq.s32.totalorder %s218, 0
      %s221 = sadd.s32 %s220, 1
      %s222 = scalar_select %p219, %s220, %s221
      %p225 = pneg %p219
      %p226 = scmp.eq.s32.totalorder %s21, 7
      %p227 = por %p225, %p226
      %p228 = scmp.ne.s32.totalorder %s220, %s223
      %p229 = scmp.eq.s32.totalorder %s21, 0
      %p230 = por %p228, %p229
      %p231 = scmp.ne.s32.totalorder %s220, %s223
      %p232 = scmp.eq.s32.totalorder %s26, 7
      %p233 = por %p231, %p232
      %p234 = scmp.ne.s32.totalorder %s223, %s224
      %p235 = scmp.eq.s32.totalorder %s26, 0
      %p236 = por %p234, %p235
      %p237 = scmp.ne.s32.totalorder %s223, %s224
      %p238 = scmp.eq.s32.totalorder %s27, 7
      %p239 = por %p237, %p238
      %p241 = scmp.ne.s32.totalorder %s224, %s240
      %p242 = scmp.eq.s32.totalorder %s27, 0
      %p243 = por %p241, %p242
      %s244 = ssub.s32 %s28, %s40
      %s245 = ssub.s32 %s29, %s36
      %s246 = sor.u32 %s244, %s245
      %p247 = scmp.eq.s32.totalorder %s246, 0
      %s249 = sadd.s32 %s248, 1
      %s250 = scalar_select %p247, %s248, %s249
      %p253 = pneg %p247
      %p254 = scmp.eq.s32.totalorder %s21, 7
      %p255 = por %p253, %p254
      %p256 = scmp.ne.s32.totalorder %s248, %s251
      %p257 = scmp.eq.s32.totalorder %s21, 0
      %p258 = por %p256, %p257
      %p259 = scmp.ne.s32.totalorder %s248, %s251
      %p260 = scmp.eq.s32.totalorder %s26, 7
      %p261 = por %p259, %p260
      %p262 = scmp.ne.s32.totalorder %s251, %s252
      %p263 = scmp.eq.s32.totalorder %s26, 0
      %p264 = por %p262, %p263
      %p265 = scmp.ne.s32.totalorder %s251, %s252
      %p266 = scmp.eq.s32.totalorder %s27, 7
      %p267 = por %p265, %p266
      %p269 = scmp.ne.s32.totalorder %s252, %s268
      %p270 = scmp.eq.s32.totalorder %s27, 0
      %p271 = por %p269, %p270
      %p272 = scmp.le.s32.totalorder 1, %s21
      %p273 = scmp.lt.s32.totalorder %s21, 9
      %p274 = pnand %p272, %p273
      %p275 = pneg %p274
      // Predicated region
      $region9: #{tpu_custom_call.1} parent=5 // pred_check
        _
      $region10: #{tpu_custom_call.1} parent=5 // pred_check_branch
        %277 = sbr.rel (%p274) target = $region12
      $region11: #{tpu_custom_call.1} parent=5 // pred_region
        %s278 = ssub.s32 %s21, 1
        // Predicated region
        $region13: #{tpu_custom_call.1} parent=11 // pred_check
          %p279 = pneg %p210
        $region14: #{tpu_custom_call.1} parent=11 // pred_check_branch
          %281 = sbr.rel (%p279) target = $region16
        $region15: #{tpu_custom_call.1} parent=11 // pred_region
          _
        $region16: #{tpu_custom_call.1} parent=11 // pred_fallthru
          _
      $region12: #{tpu_custom_call.1} parent=5 // pred_fallthru
        _
      %p282 = scmp.lt.s32.totalorder %s21, 8
      // Predicated region
      $region17: #{tpu_custom_call.1} parent=5 // pred_check
        %p283 = pneg %p282
      $region18: #{tpu_custom_call.1} parent=5 // pred_check_branch
        %285 = sbr.rel (%p283) target = $region20
      $region19: #{tpu_custom_call.1} parent=5 // pred_region
        // Predicated region
        $region21: #{tpu_custom_call.1} parent=19 // pred_check
          %p286 = pneg %p53
        $region22: #{tpu_custom_call.1} parent=19 // pred_check_branch
          %288 = sbr.rel (%p286) target = $region24
        $region23: #{tpu_custom_call.1} parent=19 // pred_region
          %p289 = scmp.lt.s32.totalorder %s28, 1
          %s290 = scalar_select %p289, %s28, 1
          %s291 = smul.addr %s290, 4
          %s292 = scalar_lea.vmem %s0, %s291
        $region24: #{tpu_custom_call.1} parent=19 // pred_fallthru
          _
        // Predicated region
        $region25: #{tpu_custom_call.1} parent=19 // pred_check
          %p293 = pneg %p79
        $region26: #{tpu_custom_call.1} parent=19 // pred_check_branch
          %295 = sbr.rel (%p293) target = $region28
        $region27: #{tpu_custom_call.1} parent=19 // pred_region
          %p296 = scmp.lt.s32.totalorder %s29, 3
          %s297 = scalar_select %p296, %s29, 3
          %s298 = smul.addr %s297, 4
          %s299 = smul.addr %s298, 4
          %s300 = scalar_lea.vmem %s1, %s299
        $region28: #{tpu_custom_call.1} parent=19 // pred_fallthru
          _
        // Predicated region
        $region29: #{tpu_custom_call.1} parent=19 // pred_check
          %p301 = pneg %p105
        $region30: #{tpu_custom_call.1} parent=19 // pred_check_branch
          %303 = sbr.rel (%p301) target = $region32
        $region31: #{tpu_custom_call.1} parent=19 // pred_region
          %p304 = scmp.lt.s32.totalorder %s29, 3
          %s305 = scalar_select %p304, %s29, 3
          %s306 = smul.addr %s305, 4
          %s307 = smul.addr %s306, 4
          %s308 = scalar_lea.vmem %s2, %s307
        $region32: #{tpu_custom_call.1} parent=19 // pred_fallthru
          _
        // Predicated region
        $region33: #{tpu_custom_call.1} parent=19 // pred_check
          %p309 = pneg %p131
        $region34: #{tpu_custom_call.1} parent=19 // pred_check_branch
          %311 = sbr.rel (%p309) target = $region36
        $region35: #{tpu_custom_call.1} parent=19 // pred_region
          %p312 = scmp.lt.s32.totalorder %s29, 3
          %s313 = scalar_select %p312, %s29, 3
          %s314 = smul.addr %s313, 4
          %s315 = smul.addr %s314, 4
          %s316 = scalar_lea.vmem %s3, %s315
        $region36: #{tpu_custom_call.1} parent=19 // pred_fallthru
          _
        // Predicated region
        $region37: #{tpu_custom_call.1} parent=19 // pred_check
          %p317 = pneg %p157
        $region38: #{tpu_custom_call.1} parent=19 // pred_check_branch
          %319 = sbr.rel (%p317) target = $region40
        $region39: #{tpu_custom_call.1} parent=19 // pred_region
          %p320 = scmp.lt.s32.totalorder %s29, 3
          %s321 = scalar_select %p320, %s29, 3
          %s322 = smul.addr %s321, 4
          %s323 = scalar_lea.vmem %s4, %s322
        $region40: #{tpu_custom_call.1} parent=19 // pred_fallthru
          _
        // Predicated region
        $region41: #{tpu_custom_call.1} parent=19 // pred_check
          %p324 = pneg %p183
        $region42: #{tpu_custom_call.1} parent=19 // pred_check_branch
          %326 = sbr.rel (%p324) target = $region44
        $region43: #{tpu_custom_call.1} parent=19 // pred_region
          %p327 = scmp.lt.s32.totalorder %s29, 3
          %s328 = scalar_select %p327, %s29, 3
          %s329 = smul.addr %s328, 4
          %s330 = scalar_lea.vmem %s5, %s329
        $region44: #{tpu_custom_call.1} parent=19 // pred_fallthru
          _
      $region20: #{tpu_custom_call.1} parent=5 // pred_fallthru
        _
      %p331 = scmp.le.s32.totalorder 1, %s21
      %p332 = scmp.lt.s32.totalorder %s21, 9
      %p333 = pnand %p331, %p332
      %p334 = pneg %p333
      // Predicated region
      $region45: #{tpu_custom_call.1} parent=5 // pred_check
        _
      $region46: #{tpu_custom_call.1} parent=5 // pred_check_branch
        %336 = sbr.rel (%p333) target = $region48
      $region47: #{tpu_custom_call.1} parent=5 // pred_region
        %s337 = ssub.s32 %s21, 1
        %p338 = scmp.lt.s32.totalorder %s30, 1
        %s339 = scalar_select %p338, %s30, 1
        %s340 = smul.addr %s339, 4
        %s341 = scalar_lea.vmem %s0, %s340
        %p342 = pneg %p59
        %p343 = pneg %p56
        %p344 = scmp.lt.s32.totalorder %s31, 3
        %s345 = scalar_select %p344, %s31, 3
        %s346 = smul.addr %s345, 4
        %s347 = smul.addr %s346, 4
        %s348 = scalar_lea.vmem %s1, %s347
        %p349 = pneg %p85
        %p350 = pneg %p82
        %p351 = scmp.lt.s32.totalorder %s31, 3
        %s352 = scalar_select %p351, %s31, 3
        %s353 = smul.addr %s352, 4
        %s354 = smul.addr %s353, 4
        %s355 = scalar_lea.vmem %s2, %s354
        %p356 = pneg %p111
        %p357 = pneg %p108
        %p358 = scmp.lt.s32.totalorder %s31, 3
        %s359 = scalar_select %p358, %s31, 3
        %s360 = smul.addr %s359, 4
        %s361 = smul.addr %s360, 4
        %s362 = scalar_lea.vmem %s3, %s361
        %p363 = pneg %p137
        %p364 = pneg %p134
        %p365 = scmp.lt.s32.totalorder %s31, 3
        %s366 = scalar_select %p365, %s31, 3
        %s367 = smul.addr %s366, 4
        %s368 = scalar_lea.vmem %s4, %s367
        %p369 = pneg %p163
        %p370 = pneg %p160
        %p371 = scmp.lt.s32.totalorder %s31, 3
        %s372 = scalar_select %p371, %s31, 3
        %s373 = smul.addr %s372, 4
        %s374 = scalar_lea.vmem %s5, %s373
        %p375 = pneg %p189
        %p376 = pneg %p186
        %p377 = pneg %p210
        %p378 = pneg %p207
        %p379 = pneg %p236
        %p380 = pneg %p233
        %s381 = sand.u32 %s223, 1
        %s382 = scalar_lea.sflag [#allocation4], %s381
        %s383 = sand.u32 %s223, 1
        %s384 = smul.addr %s383, 8
        %s385 = scalar_lea.vmem [#allocation3], %s384
        %p386 = pneg %p264
        %p387 = pneg %p261
        %s388 = sand.u32 %s251, 1
        %s389 = scalar_lea.sflag [#allocation6], %s388
        %s390 = sand.u32 %s251, 1
        %s391 = smul.addr %s390, 8
        %s392 = scalar_lea.vmem [#allocation5], %s391
        %p393 = scmp.lt.s32.totalorder %s30, 1
        %s394 = scalar_select %p393, %s30, 1
        %s395 = smul.addr %s394, 4
        %s396 = scalar_lea.vmem %s0, %s395
        %p397 = scmp.lt.s32.totalorder %s31, 3
        %s398 = scalar_select %p397, %s31, 3
        %s399 = smul.addr %s398, 4
        %s400 = smul.addr %s399, 4
        %s401 = scalar_lea.vmem %s1, %s400
        %p402 = scmp.lt.s32.totalorder %s31, 3
        %s403 = scalar_select %p402, %s31, 3
        %s404 = smul.addr %s403, 4
        %s405 = smul.addr %s404, 4
        %s406 = scalar_lea.vmem %s2, %s405
        %p407 = scmp.lt.s32.totalorder %s31, 3
        %s408 = scalar_select %p407, %s31, 3
        %s409 = smul.addr %s408, 4
        %s410 = smul.addr %s409, 4
        %s411 = scalar_lea.vmem %s3, %s410
        %p412 = scmp.lt.s32.totalorder %s31, 3
        %s413 = scalar_select %p412, %s31, 3
        %s414 = smul.addr %s413, 4
        %s415 = scalar_lea.vmem %s4, %s414
        %p416 = scmp.lt.s32.totalorder %s31, 3
        %s417 = scalar_select %p416, %s31, 3
        %s418 = smul.addr %s417, 4
        %s419 = scalar_lea.vmem %s5, %s418
        %v421 = vld [vmem:[%s396] sm:$0xf]
        %v422 = vld [vmem:[%s401] sm:$0xf]
        %v423 = vld [vmem:[%s401 + $0x4] sm:$0xf]
        %v424 = vld [vmem:[%s401 + $0x8] sm:$0xf]
        %v425 = vld [vmem:[%s401 + $0xc] sm:$0xf]
        %v426 = vld [vmem:[%s419] sm:$0x1]
        %v427 = vlaneseq
        %v428 = vshrl.u32 %v427, 7
        %v429 = vsub.s32 0, %v428
        %v430 = vrot.slane %v426, %v429
        %v435 = vunpack.c.l.b16 %v422
        %v436 = vunpack.c.l.b16 %v423
        %v437 = vunpack.c.l.b16 %v424
        %v438 = vunpack.c.l.b16 %v425
        %v439 = vpack.c.b16 %v436, %v435
        %v440 = vpack.c.b16 %v438, %v437
        %vm443 = vcmask 261120
        %v445 = vsel %vm443, %v421, 0
        %447 = vmatprep.subr.bf16.mxu0 0
        %448 = vmatpush1.bf16.msra.mxu0 %v439
        %449 = vmatprep.subr.bf16.mxu0 0
        %450 = vmatpush1.bf16.msra.mxu0 %v440
        %451 = vmatprep.subr.bf16.mxu0 0
        %452 = vmatpush1.bf16.msra.mxu0 0
        %453 = vmatprep.subr.bf16.mxu0 0
        %454 = vmatpush1.bf16.msra.mxu0 0
        %455 = vmatprep.subr.bf16.mxu0 0
        %456 = vmatpush1.bf16.msra.mxu0 0
        %457 = vmatprep.subr.bf16.mxu0 0
        %458 = vmatpush1.bf16.msra.mxu0 0
        %459 = vmatprep.subr.bf16.mxu0 0
        %460 = vmatpush1.bf16.msra.mxu0 0
        %461 = vmatprep.subr.bf16.mxu0 0
        %462 = vmatpush1.bf16.msra.mxu0 0
        %463 = vmatprep.subr.bf16.mxu0 0
        %464 = vmatpush1.bf16.msra.mxu0 0
        %465 = vmatprep.subr.bf16.mxu0 0
        %466 = vmatpush1.bf16.msra.mxu0 0
        %467 = vmatprep.subr.bf16.mxu0 0
        %468 = vmatpush1.bf16.msra.mxu0 0
        %469 = vmatprep.subr.bf16.mxu0 0
        %470 = vmatpush1.bf16.msra.mxu0 0
        %471 = vmatprep.subr.bf16.mxu0 0
        %472 = vmatpush1.bf16.msra.mxu0 0
        %473 = vmatprep.subr.bf16.mxu0 0
        %474 = vmatpush1.bf16.msra.mxu0 0
        %475 = vmatprep.subr.bf16.mxu0 0
        %476 = vmatpush1.bf16.msra.mxu0 0
        %477 = vmatprep.subr.bf16.mxu0 0
        %478 = vmatpush1.bf16.msra.mxu0 0
        %479 = vmatprep.mubr.bf16.mxu0 0
        %480 = vmatmul.mubr.bf16.gmra.mrb[0].mxu0 %v445
        %v481 = vpop.f32.mrb[0].mxu0
        %v482 = vadd.f32 %v430, %v481
        %v483 = vpop.f32.mrb[0].mxu0
        %v484 = vpop.f32.mrb[0].mxu0
        %v485 = vpop.f32.mrb[0].mxu0
        %486 = vdwg.mxu0
        %v487 = vmul.f32 %v482, 0.35355338
        %v488 = vld [vmem:[%s406] sm:$0xf]
        %v489 = vld [vmem:[%s406 + $0x4] sm:$0xf]
        %v490 = vld [vmem:[%s406 + $0x8] sm:$0xf]
        %v491 = vld [vmem:[%s406 + $0xc] sm:$0xf]
        %v492 = vld [vmem:[%s419 + $0x1] sm:$0x1]
        %v493 = vlaneseq
        %v494 = vshrl.u32 %v493, 7
        %v495 = vsub.s32 0, %v494
        %v496 = vrot.slane %v492, %v495
        %v501 = vunpack.c.l.b16 %v488
        %v502 = vunpack.c.l.b16 %v489
        %v503 = vunpack.c.l.b16 %v490
        %v504 = vunpack.c.l.b16 %v491
        %v505 = vpack.c.b16 %v502, %v501
        %v506 = vpack.c.b16 %v504, %v503
        %509 = vmatprep.subr.bf16.mxu0 0
        %510 = vmatpush1.bf16.msra.mxu0 %v505
        %511 = vmatprep.subr.bf16.mxu0 0
        %512 = vmatpush1.bf16.msra.mxu0 %v506
        %513 = vmatprep.subr.bf16.mxu0 0
        %514 = vmatpush1.bf16.msra.mxu0 0
        %515 = vmatprep.subr.bf16.mxu0 0
        %516 = vmatpush1.bf16.msra.mxu0 0
        %517 = vmatprep.subr.bf16.mxu0 0
        %518 = vmatpush1.bf16.msra.mxu0 0
        %519 = vmatprep.subr.bf16.mxu0 0
        %520 = vmatpush1.bf16.msra.mxu0 0
        %521 = vmatprep.subr.bf16.mxu0 0
        %522 = vmatpush1.bf16.msra.mxu0 0
        %523 = vmatprep.subr.bf16.mxu0 0
        %524 = vmatpush1.bf16.msra.mxu0 0
        %525 = vmatprep.subr.bf16.mxu0 0
        %526 = vmatpush1.bf16.msra.mxu0 0
        %527 = vmatprep.subr.bf16.mxu0 0
        %528 = vmatpush1.bf16.msra.mxu0 0
        %529 = vmatprep.subr.bf16.mxu0 0
        %530 = vmatpush1.bf16.msra.mxu0 0
        %531 = vmatprep.subr.bf16.mxu0 0
        %532 = vmatpush1.bf16.msra.mxu0 0
        %533 = vmatprep.subr.bf16.mxu0 0
        %534 = vmatpush1.bf16.msra.mxu0 0
        %535 = vmatprep.subr.bf16.mxu0 0
        %536 = vmatpush1.bf16.msra.mxu0 0
        %537 = vmatprep.subr.bf16.mxu0 0
        %538 = vmatpush1.bf16.msra.mxu0 0
        %539 = vmatprep.subr.bf16.mxu0 0
        %540 = vmatpush1.bf16.msra.mxu0 0
        %541 = vmatprep.mubr.bf16.mxu0 0
        %542 = vmatmul.mubr.bf16.gmra.mrb[0].mxu0 %v445
        %v543 = vpop.f32.mrb[0].mxu0
        %v544 = vadd.f32 %v496, %v543
        %v545 = vpop.f32.mrb[0].mxu0
        %v546 = vpop.f32.mrb[0].mxu0
        %v547 = vpop.f32.mrb[0].mxu0
        %548 = vdwg.mxu0
        %v549 = vld [vmem:[%s411] sm:$0xf]
        %v550 = vld [vmem:[%s411 + $0x4] sm:$0xf]
        %v551 = vld [vmem:[%s411 + $0x8] sm:$0xf]
        %v552 = vld [vmem:[%s411 + $0xc] sm:$0xf]
        %v553 = vld [vmem:[%s419 + $0x2] sm:$0x1]
        %v554 = vlaneseq
        %v555 = vshrl.u32 %v554, 7
        %v556 = vsub.s32 0, %v555
        %v557 = vrot.slane %v553, %v556
        %v562 = vunpack.c.l.b16 %v549
        %v563 = vunpack.c.l.b16 %v550
        %v564 = vunpack.c.l.b16 %v551
        %v565 = vunpack.c.l.b16 %v552
        %v566 = vpack.c.b16 %v563, %v562
        %v567 = vpack.c.b16 %v565, %v564
        %570 = vmatprep.subr.bf16.mxu0 0
        %571 = vmatpush1.bf16.msra.mxu0 %v566
        %572 = vmatprep.subr.bf16.mxu0 0
        %573 = vmatpush1.bf16.msra.mxu0 %v567
        %574 = vmatprep.subr.bf16.mxu0 0
        %575 = vmatpush1.bf16.msra.mxu0 0
        %576 = vmatprep.subr.bf16.mxu0 0
        %577 = vmatpush1.bf16.msra.mxu0 0
        %578 = vmatprep.subr.bf16.mxu0 0
        %579 = vmatpush1.bf16.msra.mxu0 0
        %580 = vmatprep.subr.bf16.mxu0 0
        %581 = vmatpush1.bf16.msra.mxu0 0
        %582 = vmatprep.subr.bf16.mxu0 0
        %583 = vmatpush1.bf16.msra.mxu0 0
        %584 = vmatprep.subr.bf16.mxu0 0
        %585 = vmatpush1.bf16.msra.mxu0 0
        %586 = vmatprep.subr.bf16.mxu0 0
        %587 = vmatpush1.bf16.msra.mxu0 0
        %588 = vmatprep.subr.bf16.mxu0 0
        %589 = vmatpush1.bf16.msra.mxu0 0
        %590 = vmatprep.subr.bf16.mxu0 0
        %591 = vmatpush1.bf16.msra.mxu0 0
        %592 = vmatprep.subr.bf16.mxu0 0
        %593 = vmatpush1.bf16.msra.mxu0 0
        %594 = vmatprep.subr.bf16.mxu0 0
        %595 = vmatpush1.bf16.msra.mxu0 0
        %596 = vmatprep.subr.bf16.mxu0 0
        %597 = vmatpush1.bf16.msra.mxu0 0
        %598 = vmatprep.subr.bf16.mxu0 0
        %599 = vmatpush1.bf16.msra.mxu0 0
        %600 = vmatprep.subr.bf16.mxu0 0
        %601 = vmatpush1.bf16.msra.mxu0 0
        %602 = vmatprep.mubr.bf16.mxu0 0
        %603 = vmatmul.mubr.bf16.gmra.mrb[0].mxu0 %v445
        %v604 = vpop.f32.mrb[0].mxu0
        %v605 = vadd.f32 %v557, %v604
        %v606 = vpop.f32.mrb[0].mxu0
        %v607 = vpop.f32.mrb[0].mxu0
        %v608 = vpop.f32.mrb[0].mxu0
        %609 = vdwg.mxu0
        %v610 = vpack.c.bf16 %v487, %v487
        %v611 = vpack.c.bf16 %v544, %v544
        %vm612 = vcmask 64512
        %v614 = vsel %vm612, %v610, 0
        %v617 = vsel %vm612, %v611, 0
        %619 = vmatprep.subr.bf16.mxu0 0
        %620 = vmatpush1.bf16.xpose.msra.mxu0 %v617
        %621 = vmatprep.subr.bf16.mxu0 0
        %622 = vmatpush1.bf16.xpose.msra.mxu0 0
        %623 = vmatprep.subr.bf16.mxu0 0
        %624 = vmatpush1.bf16.xpose.msra.mxu0 0
        %625 = vmatprep.subr.bf16.mxu0 0
        %626 = vmatpush1.bf16.xpose.msra.mxu0 0
        %627 = vmatprep.subr.bf16.mxu0 0
        %628 = vmatpush1.bf16.xpose.msra.mxu0 0
        %629 = vmatprep.subr.bf16.mxu0 0
        %630 = vmatpush1.bf16.xpose.msra.mxu0 0
        %631 = vmatprep.subr.bf16.mxu0 0
        %632 = vmatpush1.bf16.xpose.msra.mxu0 0
        %633 = vmatprep.subr.bf16.mxu0 0
        %634 = vmatpush1.bf16.xpose.msra.mxu0 0
        %635 = vmatprep.subr.bf16.mxu0 0
        %636 = vmatpush1.bf16.xpose.msra.mxu0 0
        %637 = vmatprep.subr.bf16.mxu0 0
        %638 = vmatpush1.bf16.xpose.msra.mxu0 0
        %639 = vmatprep.subr.bf16.mxu0 0
        %640 = vmatpush1.bf16.xpose.msra.mxu0 0
        %641 = vmatprep.subr.bf16.mxu0 0
        %642 = vmatpush1.bf16.xpose.msra.mxu0 0
        %643 = vmatprep.subr.bf16.mxu0 0
        %644 = vmatpush1.bf16.xpose.msra.mxu0 0
        %645 = vmatprep.subr.bf16.mxu0 0
        %646 = vmatpush1.bf16.xpose.msra.mxu0 0
        %647 = vmatprep.subr.bf16.mxu0 0
        %648 = vmatpush1.bf16.xpose.msra.mxu0 0
        %649 = vmatprep.subr.bf16.mxu0 0
        %650 = vmatpush1.bf16.xpose.msra.mxu0 0
        %651 = vmatprep.mubr.bf16.mxu0 0
        %652 = vmatmul.mubr.bf16.gmra.mrb[0].mxu0 %v614
        %v653 = vpop.f32.mrb[0].mxu0
        %v654 = vadd.f32 0.0, %v653
        %v655 = vpop.f32.mrb[0].mxu0
        %v656 = vpop.f32.mrb[0].mxu0
        %v657 = vpop.f32.mrb[0].mxu0
        %658 = vdwg.mxu0
        %v659 = vsel %vm612, %v654, -inf
        %660 = vmax.xlane.f32.xlu0 %v659
        %v661 = vpop.xlane.xlu0 %660
        %v662 = vsub.f32 %v654, %v661
        %v663 = vmul.f32 %v662, 1.442695
        %v664 = vpow.pop %v663
        %v665 = vsel %vm612, %v664, 0.0
        %666 = vadd.xlane.f32.xlu0 %v665
        %v667 = vpop.xlane.xlu0 %666
        %v668 = vrcp.pop %v667
        %v669 = vmul.f32 %v664, %v668
        %670 = vst.msk [vmem:[%s392] sm:$0xff] %vm612, %v669
        %v671 = vpack.c.bf16 %v669, %v669
        %v672 = vpack.c.bf16 %v605, %v605
        %v674 = vsel %vm612, %v671, 0
        %vm676 = vcmask 1043456
        %v678 = vsel %vm676, %v672, 0
        %680 = vmatprep.subr.bf16.mxu0 0
        %681 = vmatpush1.bf16.msra.mxu0 %v678
        %682 = vmatprep.subr.bf16.mxu0 0
        %683 = vmatpush1.bf16.msra.mxu0 0
        %684 = vmatprep.subr.bf16.mxu0 0
        %685 = vmatpush1.bf16.msra.mxu0 0
        %686 = vmatprep.subr.bf16.mxu0 0
        %687 = vmatpush1.bf16.msra.mxu0 0
        %688 = vmatprep.subr.bf16.mxu0 0
        %689 = vmatpush1.bf16.msra.mxu0 0
        %690 = vmatprep.subr.bf16.mxu0 0
        %691 = vmatpush1.bf16.msra.mxu0 0
        %692 = vmatprep.subr.bf16.mxu0 0
        %693 = vmatpush1.bf16.msra.mxu0 0
        %694 = vmatprep.subr.bf16.mxu0 0
        %695 = vmatpush1.bf16.msra.mxu0 0
        %696 = vmatprep.subr.bf16.mxu0 0
        %697 = vmatpush1.bf16.msra.mxu0 0
        %698 = vmatprep.subr.bf16.mxu0 0
        %699 = vmatpush1.bf16.msra.mxu0 0
        %700 = vmatprep.subr.bf16.mxu0 0
        %701 = vmatpush1.bf16.msra.mxu0 0
        %702 = vmatprep.subr.bf16.mxu0 0
        %703 = vmatpush1.bf16.msra.mxu0 0
        %704 = vmatprep.subr.bf16.mxu0 0
        %705 = vmatpush1.bf16.msra.mxu0 0
        %706 = vmatprep.subr.bf16.mxu0 0
        %707 = vmatpush1.bf16.msra.mxu0 0
        %708 = vmatprep.subr.bf16.mxu0 0
        %709 = vmatpush1.bf16.msra.mxu0 0
        %710 = vmatprep.subr.bf16.mxu0 0
        %711 = vmatpush1.bf16.msra.mxu0 0
        %712 = vmatprep.mubr.bf16.mxu0 0
        %713 = vmatmul.mubr.bf16.gmra.mrb[0].mxu0 %v674
        %v714 = vpop.f32.mrb[0].mxu0
        %v715 = vadd.f32 0.0, %v714
        %v716 = vpop.f32.mrb[0].mxu0
        %v717 = vpop.f32.mrb[0].mxu0
        %v718 = vpop.f32.mrb[0].mxu0
        %719 = vdwg.mxu0
        %p720 = scmp.eq.s32.totalorder %s31, 0
        // Predicated region
        $region49: #{tpu_custom_call.1} parent=47 // pred_check
          %p721 = pneg %p720
        $region50: #{tpu_custom_call.1} parent=47 // pred_check_branch
          %723 = sbr.rel (%p721) target = $region52
        $region51: #{tpu_custom_call.1} parent=47 // pred_region
          %724 = vst.msk [vmem:[#allocation2] sm:$0xff] %vm443, 0.0
        $region52: #{tpu_custom_call.1} parent=47 // pred_fallthru
          _
        %v725 = vld [vmem:[#allocation2] sm:$0xff]
        %v726 = vpack.c.bf16 %v715, %v715
        %v727 = vld [vmem:[%s415] sm:$0xf]
        %v729 = vsel %vm612, %v726, 0
        %v732 = vsel %vm676, %v727, 0
        %734 = vmatprep.subr.bf16.mxu0 0
        %735 = vmatpush1.bf16.msra.mxu0 %v732
        %736 = vmatprep.subr.bf16.mxu0 0
        %737 = vmatpush1.bf16.msra.mxu0 0
        %738 = vmatprep.subr.bf16.mxu0 0
        %739 = vmatpush1.bf16.msra.mxu0 0
        %740 = vmatprep.subr.bf16.mxu0 0
        %741 = vmatpush1.bf16.msra.mxu0 0
        %742 = vmatprep.subr.bf16.mxu0 0
        %743 = vmatpush1.bf16.msra.mxu0 0
        %744 = vmatprep.subr.bf16.mxu0 0
        %745 = vmatpush1.bf16.msra.mxu0 0
        %746 = vmatprep.subr.bf16.mxu0 0
        %747 = vmatpush1.bf16.msra.mxu0 0
        %748 = vmatprep.subr.bf16.mxu0 0
        %749 = vmatpush1.bf16.msra.mxu0 0
        %750 = vmatprep.subr.bf16.mxu0 0
        %751 = vmatpush1.bf16.msra.mxu0 0
        %752 = vmatprep.subr.bf16.mxu0 0
        %753 = vmatpush1.bf16.msra.mxu0 0
        %754 = vmatprep.subr.bf16.mxu0 0
        %755 = vmatpush1.bf16.msra.mxu0 0
        %756 = vmatprep.subr.bf16.mxu0 0
        %757 = vmatpush1.bf16.msra.mxu0 0
        %758 = vmatprep.subr.bf16.mxu0 0
        %759 = vmatpush1.bf16.msra.mxu0 0
        %760 = vmatprep.subr.bf16.mxu0 0
        %761 = vmatpush1.bf16.msra.mxu0 0
        %762 = vmatprep.subr.bf16.mxu0 0
        %763 = vmatpush1.bf16.msra.mxu0 0
        %764 = vmatprep.subr.bf16.mxu0 0
        %765 = vmatpush1.bf16.msra.mxu0 0
        %766 = vmatprep.mubr.bf16.mxu0 0
        %767 = vmatmul.mubr.bf16.gmra.mrb[0].mxu0 %v729
        %v768 = vpop.f32.mrb[0].mxu0
        %v769 = vadd.f32 0.0, %v768
        %v770 = vpop.f32.mrb[0].mxu0
        %v771 = vpop.f32.mrb[0].mxu0
        %v772 = vpop.f32.mrb[0].mxu0
        %773 = vdwg.mxu0
        %v774 = vadd.f32 %v725, %v769
        %775 = vst.msk [vmem:[#allocation2] sm:$0xff] %vm443, %v774
        %p776 = scmp.eq.s32.totalorder %s31, 3
        // Predicated region
        $region53: #{tpu_custom_call.1} parent=47 // pred_check
          %p777 = pneg %p776
        $region54: #{tpu_custom_call.1} parent=47 // pred_check_branch
          %779 = sbr.rel (%p777) target = $region56
        $region55: #{tpu_custom_call.1} parent=47 // pred_region
          %v780 = vld [vmem:[#allocation2] sm:$0xff]
          %v781 = vld [vmem:[%s6] sm:$0x1]
          %v783 = vlaneseq
          %v784 = vshrl.u32 %v783, 7
          %v785 = vsub.s32 0, %v784
          %v786 = vrot.slane %v781, %v785
          %v788 = vadd.f32 %v780, %v786
          %789 = vst.msk [vmem:[%s385] sm:$0xff] %vm443, %v788
        $region56: #{tpu_custom_call.1} parent=47 // pred_fallthru
          _
        %s790 = sand.u32 %s223, 1
        %s791 = scalar_lea.sflag [#allocation4], %s790
        %s792 = sand.u32 %s223, 1
        %s793 = smul.addr %s792, 8
        %s794 = scalar_lea.vmem [#allocation3], %s793
        %s795 = sand.u32 %s251, 1
        %s796 = scalar_lea.sflag [#allocation6], %s795
        %s797 = sand.u32 %s251, 1
        %s798 = smul.addr %s797, 8
        %s799 = scalar_lea.vmem [#allocation5], %s798
        // Predicated region
        $region57: #{tpu_custom_call.1} parent=47 // pred_check
          %p800 = pneg %p233
        $region58: #{tpu_custom_call.1} parent=47 // pred_check_branch
          %802 = sbr.rel (%p800) target = $region60
        $region59: #{tpu_custom_call.1} parent=47 // pred_region
          %s804 = ssub.s32 128, 128
          %805 = vsyncadd %s791, %s804
          %s806 = smul.addr %s30, 128
          %s807 = scalar_lea.hbm %s7, %s806
          %s809 = sshll.u32 %s794, 4
          %s810 = int_to_ptr.vmem [resolvable:$true] %s809
          %812 = dma.vmem_to_hbm [thread:$0]  %s810, 128, %s807, %s791
        $region60: #{tpu_custom_call.1} parent=47 // pred_fallthru
          _
        // Predicated region
        $region61: #{tpu_custom_call.1} parent=47 // pred_check
          %p813 = pneg %p261
        $region62: #{tpu_custom_call.1} parent=47 // pred_check_branch
          %815 = sbr.rel (%p813) target = $region64
        $region63: #{tpu_custom_call.1} parent=47 // pred_region
          %s817 = ssub.s32 128, 128
          %818 = vsyncadd %s796, %s817
          %s819 = smul.addr %s30, 4
          %s820 = sadd.s32 %s31, %s819
          %s821 = smul.addr %s820, 128
          %s822 = scalar_lea.hbm %s8, %s821
          %s824 = sshll.u32 %s799, 4
          %s825 = int_to_ptr.vmem [resolvable:$true] %s824
          %827 = dma.vmem_to_hbm [thread:$0]  %s825, 128, %s822, %s796
        $region64: #{tpu_custom_call.1} parent=47 // pred_fallthru
          _
      $region48: #{tpu_custom_call.1} parent=5 // pred_fallthru
        _
      %p828 = scmp.le.s32.totalorder 2, %s21
      // Predicated region
      $region65: #{tpu_custom_call.1} parent=5 // pred_check
        %p829 = pneg %p828
      $region66: #{tpu_custom_call.1} parent=5 // pred_check_branch
        %831 = sbr.rel (%p829) target = $region68
      $region67: #{tpu_custom_call.1} parent=5 // pred_region
        %s832 = ssub.s32 %s21, 2
        // Predicated region
        $region69: #{tpu_custom_call.1} parent=67 // pred_check
          %p833 = pneg %p239
        $region70: #{tpu_custom_call.1} parent=67 // pred_check_branch
          %835 = sbr.rel (%p833) target = $region72
        $region71: #{tpu_custom_call.1} parent=67 // pred_region
          %s836 = sand.u32 %s224, 1
          %s837 = scalar_lea.sflag [#allocation4], %s836
          %s838 = sand.u32 %s224, 1
          %s839 = smul.addr %s838, 8
          %s840 = scalar_lea.vmem [#allocation3], %s839
          %841 = dma.done %s837, 128
        $region72: #{tpu_custom_call.1} parent=67 // pred_fallthru
          _
        // Predicated region
        $region73: #{tpu_custom_call.1} parent=67 // pred_check
          %p842 = pneg %p267
        $region74: #{tpu_custom_call.1} parent=67 // pred_check_branch
          %844 = sbr.rel (%p842) target = $region76
        $region75: #{tpu_custom_call.1} parent=67 // pred_region
          %s845 = sand.u32 %s252, 1
          %s846 = scalar_lea.sflag [#allocation6], %s845
          %s847 = sand.u32 %s252, 1
          %s848 = smul.addr %s847, 8
          %s849 = scalar_lea.vmem [#allocation5], %s848
          %850 = dma.done %s846, 128
        $region76: #{tpu_custom_call.1} parent=67 // pred_fallthru
          _
      $region68: #{tpu_custom_call.1} parent=5 // pred_fallthru
        _
    $region6: #{tpu_custom_call.1} parent=1 // loop_footer
      %s25 = sadd.s32 1, %s21
    $region7: #{tpu_custom_call.1} parent=1 // loop_footer_branch
      %20 = sbr.rel target = $region3
    $region8: #{tpu_custom_call.1} parent=1 // loop_exit
      _
    %851 = vsyncpa [#allocation4], 1
    %s852 = scalar_lea.sflag [#allocation4], 1
    %853 = vsyncpa %s852, 1
    %854 = vsyncpa [#allocation6], 1
    %s855 = scalar_lea.sflag [#allocation6], 1
    %856 = vsyncpa %s855, 1

</llo_original>
